<compile_context>
chip_gen: v6e
topology: v6e:2x2x1
jax: 0.10.0
libtpu: 0.0.40
codegen_flags: <defaults>
</compile_context>

<pallas_src>
import math

import jax
import jax.numpy as jnp
from jax import lax
from jax.experimental import pallas as pl
from jax.experimental.pallas import tpu as pltpu

# ---- CrossAttention / Truncated_power hyper-parameters (from module init) ----
DEGREE = 5
KNOTS = (1.0 / 3.0, 2.0 / 3.0)
NUM_BASIS = DEGREE + 1 + len(KNOTS)  # = 8


def _vmem_spec():
    # Whole (small) arrays resident in VMEM, no grid tiling needed at these
    # shapes.
    return pl.BlockSpec(memory_space=pltpu.MemorySpace.VMEM)


# -----------------------------------------------------------------------------
# Fused kernel:  EncoderNet (Linear->ReLU->Linear->ReLU->Linear)
#             -> CrossAttention (spline basis -> Q/K/V -> batch attention
#                                -> residual -> fc)
# -----------------------------------------------------------------------------
def acfr_kernel(
    x_ref, t_ref,
    w1_ref, b1_ref, w2_ref, b2_ref, w3_ref, b3_ref,
    wq_ref, bq_ref, wk_ref, bk_ref, wv_ref, bv_ref, wf_ref, bf_ref,
    y_ref, z_ref,
):
    # ---------------- EncoderNet ----------------
    # TODO(synk): nn.Dropout(p=0.5) is stochastic in train mode; implemented as
    #             identity (eval / inference semantics).
    h = jnp.dot(x_ref[...], w1_ref[...], preferred_element_type=jnp.float32) + b1_ref[...]
    h = jnp.maximum(h, 0.0)
    h = jnp.dot(h, w2_ref[...], preferred_element_type=jnp.float32) + b2_ref[...]
    h = jnp.maximum(h, 0.0)
    z = jnp.dot(h, w3_ref[...], preferred_element_type=jnp.float32) + b3_ref[...]

    # ---------------- CrossAttention ----------------
    t = t_ref[...]          # (B, 1), treatment assumed in [0, 1]
    wq = wq_ref[...]        # (NUM_BASIS, hidden)
    hidden = wq.shape[1]
    inv_sqrt_hidden = 1.0 / math.sqrt(hidden)

    # q = truncated_power_basis(t) @ wq + bq, computed as a running VPU
    # multiply-add over the 8 basis rows of wq (no column concat, no tiny
    # K=8 MXU matmul).  Integer powers built iteratively (p *= t).
    q = bq_ref[...] + wq[0:1, :]                      # constant basis + bias, (1, H)
    p = t                                             # t^1
    for j in range(1, DEGREE + 1):
        q = q + p * wq[j:j + 1, :]                    # (B,1)*(1,H) -> (B,H)
        if j < DEGREE:
            p = p * t
    for i, knot in enumerate(KNOTS):
        r = jnp.maximum(t - knot, 0.0)
        q = q + (r ** DEGREE) * wq[DEGREE + 1 + i:DEGREE + 2 + i, :]
    # Fold the 1/sqrt(hidden) score scale into q (removes a (B,B) elementwise op).
    q = q * inv_sqrt_hidden

    k = jnp.dot(z, wk_ref[...], preferred_element_type=jnp.float32) + bk_ref[...]
    v = jnp.dot(z, wv_ref[...], preferred_element_type=jnp.float32) + bv_ref[...]

    # scores = q @ k^T without materializing the transpose: contract dim 1 of
    # both operands directly on the MXU.
    scores = lax.dot_general(
        q, k, dimension_numbers=(((1,), (1,)), ((), ())),
        preferred_element_type=jnp.float32,
    )  # (B, B)

    # Numerically-stable softmax; denominator via EUP approximate reciprocal,
    # applied after the (B, H) context matmul rather than on the (B, B) matrix.
    m = jnp.max(scores, axis=-1, keepdims=True)
    e = jnp.exp(scores - m)
    inv_l = pl.reciprocal(jnp.sum(e, axis=-1, keepdims=True), approx=True)

    ctx = jnp.dot(e, v, preferred_element_type=jnp.float32) * inv_l
    out = ctx + z  # residual (hidden_dim == input_dim in ACFR)

    y_ref[...] = (
        jnp.dot(out, wf_ref[...], preferred_element_type=jnp.float32) + bf_ref[...]
    )
    z_ref[...] = z

    # TODO(synk): for large batch sizes this whole-batch-resident kernel should
    #             be re-tiled: batch-gridded encoder (TILE_B>=128, "parallel")
    #             plus a flash-style online softmax over key tiles, since the
    #             attention mixes samples across the full batch and cannot be
    #             naively sharded.


# -----------------------------------------------------------------------------
# ACFR.forward(x, t) -> (y_hat, z)  -- single fused pallas_call
# -----------------------------------------------------------------------------
def acfr_forward(x, t, params):
    B = x.shape[0]
    pe, pa = params["enc"], params["atten"]
    d_z = pe["w3"].shape[1]
    out_dim = pa["wf"].shape[1]

    args = (
        x, t,
        pe["w1"], pe["b1"], pe["w2"], pe["b2"], pe["w3"], pe["b3"],
        pa["wq"], pa["bq"], pa["wk"], pa["bk"], pa["wv"], pa["bv"],
        pa["wf"], pa["bf"],
    )
    y_hat, z = pl.pallas_call(
        acfr_kernel,
        out_shape=(
            jax.ShapeDtypeStruct((B, out_dim), jnp.float32),
            jax.ShapeDtypeStruct((B, d_z), jnp.float32),
        ),
        in_specs=[_vmem_spec()] * len(args),
        out_specs=(_vmem_spec(), _vmem_spec()),
    )(*args)
    return y_hat, z


# -----------------------------------------------------------------------------
# Deterministic parameter init (PyTorch-Linear-like uniform bounds)
# -----------------------------------------------------------------------------
def _linear_params(key, d_in, d_out):
    kw, kb = jax.random.split(key)
    bound = 1.0 / math.sqrt(d_in)
    w = jax.random.uniform(kw, (d_in, d_out), jnp.float32, -bound, bound)
    b = jax.random.uniform(kb, (1, d_out), jnp.float32, -bound, bound)
    return w, b


def init_params(key, d_in, h1, h2, d_z, hidden, out_dim):
    keys = jax.random.split(key, 7)
    w1, b1 = _linear_params(keys[0], d_in, h1)
    w2, b2 = _linear_params(keys[1], h1, h2)
    w3, b3 = _linear_params(keys[2], h2, d_z)
    wq, bq = _linear_params(keys[3], NUM_BASIS, hidden)
    wk, bk = _linear_params(keys[4], d_z, hidden)
    wv, bv = _linear_params(keys[5], d_z, hidden)
    wf, bf = _linear_params(keys[6], hidden, out_dim)
    return {
        "enc": {"w1": w1, "b1": b1, "w2": w2, "b2": b2, "w3": w3, "b3": b3},
        "atten": {"wq": wq, "bq": bq, "wk": wk, "bk": bk, "wv": wv, "bv": bv,
                  "wf": wf, "bf": bf},
    }


# -----------------------------------------------------------------------------
# Pure-JAX reference (same math, no Pallas) for a correctness check
# -----------------------------------------------------------------------------
def _reference(x, t, params):
    pe = params["enc"]
    h = jnp.maximum(x @ pe["w1"] + pe["b1"], 0.0)
    h = jnp.maximum(h @ pe["w2"] + pe["b2"], 0.0)
    z = h @ pe["w3"] + pe["b3"]

    pa = params["atten"]
    cols = [jnp.ones_like(t)]
    for j in range(1, DEGREE + 1):
        cols.append(t ** j)
    for knot in KNOTS:
        cols.append(jnp.maximum(t - knot, 0.0) ** DEGREE)
    t_out = jnp.concatenate(cols, axis=-1)

    q = t_out @ pa["wq"] + pa["bq"]
    k = z @ pa["wk"] + pa["bk"]
    v = z @ pa["wv"] + pa["bv"]
    scores = (q @ k.T) / math.sqrt(q.shape[-1])
    attn = jax.nn.softmax(scores, axis=-1)
    out = attn @ v + z
    y = out @ pa["wf"] + pa["bf"]
    return y, z


if __name__ == "__main__":
    # Small shapes consistent with the module:
    #   EncoderNet: input_dim=16, hidden_dims=[32, 32], output_dim=16
    #   CrossAttention: input_dim = hidden_dim = 16, output_dim = 1, degree = 5
    B, D_IN, H1, H2, D_Z, HIDDEN, OUT = 8, 16, 32, 32, 16, 16, 1

    key = jax.random.PRNGKey(0)
    kp, kx, kt = jax.random.split(key, 3)
    params = init_params(kp, D_IN, H1, H2, D_Z, HIDDEN, OUT)

    x = jax.random.normal(kx, (B, D_IN), jnp.float32)
    t = jax.random.uniform(kt, (B, 1), jnp.float32)  # treatment assumed in [0, 1]

    y_hat, z = acfr_forward(x, t, params)
    jax.block_until_ready((y_hat, z))

    y_ref, z_ref = _reference(x, t, params)
    assert y_hat.shape == (B, OUT) and z.shape == (B, D_Z)
    # Slightly looser tolerance on y: softmax denominator uses the EUP
    # approximate reciprocal.
    assert jnp.allclose(y_hat, y_ref, atol=5e-3, rtol=5e-3)
    assert jnp.allclose(z, z_ref, atol=1e-3, rtol=1e-3)

    print("KERNEL_OK")
</pallas_src>

<mosaic_0001>
module attributes {stable_mosaic.version = 11 : i64} {
  func.func @acfr_kernel(%arg0: memref<8x16xf32, #tpu.memory_space<vmem>>, %arg1: memref<8x1xf32, #tpu.memory_space<vmem>>, %arg2: memref<16x32xf32, #tpu.memory_space<vmem>>, %arg3: memref<1x32xf32, #tpu.memory_space<vmem>>, %arg4: memref<32x32xf32, #tpu.memory_space<vmem>>, %arg5: memref<1x32xf32, #tpu.memory_space<vmem>>, %arg6: memref<32x16xf32, #tpu.memory_space<vmem>>, %arg7: memref<1x16xf32, #tpu.memory_space<vmem>>, %arg8: memref<8x16xf32, #tpu.memory_space<vmem>>, %arg9: memref<1x16xf32, #tpu.memory_space<vmem>>, %arg10: memref<16x16xf32, #tpu.memory_space<vmem>>, %arg11: memref<1x16xf32, #tpu.memory_space<vmem>>, %arg12: memref<16x16xf32, #tpu.memory_space<vmem>>, %arg13: memref<1x16xf32, #tpu.memory_space<vmem>>, %arg14: memref<16x1xf32, #tpu.memory_space<vmem>>, %arg15: memref<1x1xf32, #tpu.memory_space<vmem>>, %arg16: memref<8x1xf32, #tpu.memory_space<vmem>>, %arg17: memref<8x16xf32, #tpu.memory_space<vmem>>) attributes {dimension_semantics = [], scalar_prefetch = 0 : i64, scratch_operands = 0 : i64, tpu.core_type = #tpu.core_type<tc>} {
    %c0 = arith.constant 0 : index
    %c0_0 = arith.constant 0 : index
    %0 = vector.load %arg0[%c0, %c0_0] : memref<8x16xf32, #tpu.memory_space<vmem>>, vector<8x16xf32>
    %c0_1 = arith.constant 0 : index
    %c0_2 = arith.constant 0 : index
    %1 = vector.load %arg2[%c0_1, %c0_2] : memref<16x32xf32, #tpu.memory_space<vmem>>, vector<16x32xf32>
    %cst = arith.constant dense<0.000000e+00> : vector<8x32xf32>
    %2 = tpu.matmul %0, %1, %cst {dimension_numbers = #tpu.dot_dimension_numbers<[1], [0], [0], [1], [0, 0, 1, 1], [], []>} : vector<8x16xf32>, vector<16x32xf32>, vector<8x32xf32> -> vector<8x32xf32>
    %c0_3 = arith.constant 0 : index
    %c0_4 = arith.constant 0 : index
    %3 = vector.load %arg3[%c0_3, %c0_4] : memref<1x32xf32, #tpu.memory_space<vmem>>, vector<1x32xf32>
    %4 = vector.broadcast %3 : vector<1x32xf32> to vector<8x32xf32>
    %5 = arith.addf %2, %4 : vector<8x32xf32>
    %cst_5 = arith.constant 0.000000e+00 : f32
    %6 = vector.broadcast %cst_5 : f32 to vector<8x32xf32>
    %7 = arith.maximumf %5, %6 : vector<8x32xf32>
    %c0_6 = arith.constant 0 : index
    %c0_7 = arith.constant 0 : index
    %8 = vector.load %arg4[%c0_6, %c0_7] : memref<32x32xf32, #tpu.memory_space<vmem>>, vector<32x32xf32>
    %cst_8 = arith.constant dense<0.000000e+00> : vector<8x32xf32>
    %9 = tpu.matmul %7, %8, %cst_8 {dimension_numbers = #tpu.dot_dimension_numbers<[1], [0], [0], [1], [0, 0, 1, 1], [], []>} : vector<8x32xf32>, vector<32x32xf32>, vector<8x32xf32> -> vector<8x32xf32>
    %c0_9 = arith.constant 0 : index
    %c0_10 = arith.constant 0 : index
    %10 = vector.load %arg5[%c0_9, %c0_10] : memref<1x32xf32, #tpu.memory_space<vmem>>, vector<1x32xf32>
    %11 = vector.broadcast %10 : vector<1x32xf32> to vector<8x32xf32>
    %12 = arith.addf %9, %11 : vector<8x32xf32>
    %cst_11 = arith.constant 0.000000e+00 : f32
    %13 = vector.broadcast %cst_11 : f32 to vector<8x32xf32>
    %14 = arith.maximumf %12, %13 : vector<8x32xf32>
    %c0_12 = arith.constant 0 : index
    %c0_13 = arith.constant 0 : index
    %15 = vector.load %arg6[%c0_12, %c0_13] : memref<32x16xf32, #tpu.memory_space<vmem>>, vector<32x16xf32>
    %cst_14 = arith.constant dense<0.000000e+00> : vector<8x16xf32>
    %16 = tpu.matmul %14, %15, %cst_14 {dimension_numbers = #tpu.dot_dimension_numbers<[1], [0], [0], [1], [0, 0, 1, 1], [], []>} : vector<8x32xf32>, vector<32x16xf32>, vector<8x16xf32> -> vector<8x16xf32>
    %c0_15 = arith.constant 0 : index
    %c0_16 = arith.constant 0 : index
    %17 = vector.load %arg7[%c0_15, %c0_16] : memref<1x16xf32, #tpu.memory_space<vmem>>, vector<1x16xf32>
    %18 = vector.broadcast %17 : vector<1x16xf32> to vector<8x16xf32>
    %19 = arith.addf %16, %18 : vector<8x16xf32>
    %c0_17 = arith.constant 0 : index
    %c0_18 = arith.constant 0 : index
    %20 = vector.load %arg1[%c0_17, %c0_18] : memref<8x1xf32, #tpu.memory_space<vmem>>, vector<8x1xf32>
    %c0_19 = arith.constant 0 : index
    %c0_20 = arith.constant 0 : index
    %21 = vector.load %arg8[%c0_19, %c0_20] : memref<8x16xf32, #tpu.memory_space<vmem>>, vector<8x16xf32>
    %c0_21 = arith.constant 0 : index
    %c0_22 = arith.constant 0 : index
    %22 = vector.load %arg9[%c0_21, %c0_22] : memref<1x16xf32, #tpu.memory_space<vmem>>, vector<1x16xf32>
    %23 = vector.extract_strided_slice %21 {offsets = [0, 0], sizes = [1, 16], strides = [1, 1]} : vector<8x16xf32> to vector<1x16xf32>
    %24 = arith.addf %22, %23 : vector<1x16xf32>
    %25 = vector.extract_strided_slice %21 {offsets = [1, 0], sizes = [1, 16], strides = [1, 1]} : vector<8x16xf32> to vector<1x16xf32>
    %26 = vector.broadcast %20 : vector<8x1xf32> to vector<8x16xf32>
    %27 = vector.broadcast %25 : vector<1x16xf32> to vector<8x16xf32>
    %28 = arith.mulf %26, %27 : vector<8x16xf32>
    %29 = vector.broadcast %24 : vector<1x16xf32> to vector<8x16xf32>
    %30 = arith.addf %29, %28 : vector<8x16xf32>
    %31 = arith.mulf %20, %20 : vector<8x1xf32>
    %32 = vector.extract_strided_slice %21 {offsets = [2, 0], sizes = [1, 16], strides = [1, 1]} : vector<8x16xf32> to vector<1x16xf32>
    %33 = vector.broadcast %31 : vector<8x1xf32> to vector<8x16xf32>
    %34 = vector.broadcast %32 : vector<1x16xf32> to vector<8x16xf32>
    %35 = arith.mulf %33, %34 : vector<8x16xf32>
    %36 = arith.addf %30, %35 : vector<8x16xf32>
    %37 = arith.mulf %31, %20 : vector<8x1xf32>
    %38 = vector.extract_strided_slice %21 {offsets = [3, 0], sizes = [1, 16], strides = [1, 1]} : vector<8x16xf32> to vector<1x16xf32>
    %39 = vector.broadcast %37 : vector<8x1xf32> to vector<8x16xf32>
    %40 = vector.broadcast %38 : vector<1x16xf32> to vector<8x16xf32>
    %41 = arith.mulf %39, %40 : vector<8x16xf32>
    %42 = arith.addf %36, %41 : vector<8x16xf32>
    %43 = arith.mulf %37, %20 : vector<8x1xf32>
    %44 = vector.extract_strided_slice %21 {offsets = [4, 0], sizes = [1, 16], strides = [1, 1]} : vector<8x16xf32> to vector<1x16xf32>
    %45 = vector.broadcast %43 : vector<8x1xf32> to vector<8x16xf32>
    %46 = vector.broadcast %44 : vector<1x16xf32> to vector<8x16xf32>
    %47 = arith.mulf %45, %46 : vector<8x16xf32>
    %48 = arith.addf %42, %47 : vector<8x16xf32>
    %49 = arith.mulf %43, %20 : vector<8x1xf32>
    %50 = vector.extract_strided_slice %21 {offsets = [5, 0], sizes = [1, 16], strides = [1, 1]} : vector<8x16xf32> to vector<1x16xf32>
    %51 = vector.broadcast %49 : vector<8x1xf32> to vector<8x16xf32>
    %52 = vector.broadcast %50 : vector<1x16xf32> to vector<8x16xf32>
    %53 = arith.mulf %51, %52 : vector<8x16xf32>
    %54 = arith.addf %48, %53 : vector<8x16xf32>
    %cst_23 = arith.constant 0.333333343 : f32
    %55 = vector.broadcast %cst_23 : f32 to vector<8x1xf32>
    %56 = arith.subf %20, %55 : vector<8x1xf32>
    %cst_24 = arith.constant 0.000000e+00 : f32
    %57 = vector.broadcast %cst_24 : f32 to vector<8x1xf32>
    %58 = arith.maximumf %56, %57 : vector<8x1xf32>
    %59 = arith.mulf %58, %58 : vector<8x1xf32>
    %60 = arith.mulf %59, %59 : vector<8x1xf32>
    %61 = arith.mulf %58, %60 : vector<8x1xf32>
    %62 = vector.extract_strided_slice %21 {offsets = [6, 0], sizes = [1, 16], strides = [1, 1]} : vector<8x16xf32> to vector<1x16xf32>
    %63 = vector.broadcast %61 : vector<8x1xf32> to vector<8x16xf32>
    %64 = vector.broadcast %62 : vector<1x16xf32> to vector<8x16xf32>
    %65 = arith.mulf %63, %64 : vector<8x16xf32>
    %66 = arith.addf %54, %65 : vector<8x16xf32>
    %cst_25 = arith.constant 0.666666686 : f32
    %67 = vector.broadcast %cst_25 : f32 to vector<8x1xf32>
    %68 = arith.subf %20, %67 : vector<8x1xf32>
    %cst_26 = arith.constant 0.000000e+00 : f32
    %69 = vector.broadcast %cst_26 : f32 to vector<8x1xf32>
    %70 = arith.maximumf %68, %69 : vector<8x1xf32>
    %71 = arith.mulf %70, %70 : vector<8x1xf32>
    %72 = arith.mulf %71, %71 : vector<8x1xf32>
    %73 = arith.mulf %70, %72 : vector<8x1xf32>
    %74 = vector.extract_strided_slice %21 {offsets = [7, 0], sizes = [1, 16], strides = [1, 1]} : vector<8x16xf32> to vector<1x16xf32>
    %75 = vector.broadcast %73 : vector<8x1xf32> to vector<8x16xf32>
    %76 = vector.broadcast %74 : vector<1x16xf32> to vector<8x16xf32>
    %77 = arith.mulf %75, %76 : vector<8x16xf32>
    %78 = arith.addf %66, %77 : vector<8x16xf32>
    %cst_27 = arith.constant 2.500000e-01 : f32
    %79 = vector.broadcast %cst_27 : f32 to vector<8x16xf32>
    %80 = arith.mulf %78, %79 : vector<8x16xf32>
    %c0_28 = arith.constant 0 : index
    %c0_29 = arith.constant 0 : index
    %81 = vector.load %arg10[%c0_28, %c0_29] : memref<16x16xf32, #tpu.memory_space<vmem>>, vector<16x16xf32>
    %cst_30 = arith.constant dense<0.000000e+00> : vector<8x16xf32>
    %82 = tpu.matmul %19, %81, %cst_30 {dimension_numbers = #tpu.dot_dimension_numbers<[1], [0], [0], [1], [0, 0, 1, 1], [], []>} : vector<8x16xf32>, vector<16x16xf32>, vector<8x16xf32> -> vector<8x16xf32>
    %c0_31 = arith.constant 0 : index
    %c0_32 = arith.constant 0 : index
    %83 = vector.load %arg11[%c0_31, %c0_32] : memref<1x16xf32, #tpu.memory_space<vmem>>, vector<1x16xf32>
    %84 = vector.broadcast %83 : vector<1x16xf32> to vector<8x16xf32>
    %85 = arith.addf %82, %84 : vector<8x16xf32>
    %c0_33 = arith.constant 0 : index
    %c0_34 = arith.constant 0 : index
    %86 = vector.load %arg12[%c0_33, %c0_34] : memref<16x16xf32, #tpu.memory_space<vmem>>, vector<16x16xf32>
    %cst_35 = arith.constant dense<0.000000e+00> : vector<8x16xf32>
    %87 = tpu.matmul %19, %86, %cst_35 {dimension_numbers = #tpu.dot_dimension_numbers<[1], [0], [0], [1], [0, 0, 1, 1], [], []>} : vector<8x16xf32>, vector<16x16xf32>, vector<8x16xf32> -> vector<8x16xf32>
    %c0_36 = arith.constant 0 : index
    %c0_37 = arith.constant 0 : index
    %88 = vector.load %arg13[%c0_36, %c0_37] : memref<1x16xf32, #tpu.memory_space<vmem>>, vector<1x16xf32>
    %89 = vector.broadcast %88 : vector<1x16xf32> to vector<8x16xf32>
    %90 = arith.addf %87, %89 : vector<8x16xf32>
    %cst_38 = arith.constant dense<0.000000e+00> : vector<8x8xf32>
    %91 = tpu.matmul %80, %85, %cst_38 {dimension_numbers = #tpu.dot_dimension_numbers<[1], [1], [0], [0], [0, 0, 1, 0], [], []>} : vector<8x16xf32>, vector<8x16xf32>, vector<8x8xf32> -> vector<8x8xf32>
    %cst_39 = arith.constant dense<0xFF800000> : vector<8xf32>
    %92 = vector.multi_reduction <maximumf>, %91, %cst_39 [1] : vector<8x8xf32> to vector<8xf32>
    %93 = vector.shape_cast %92 : vector<8xf32> to vector<8x1xf32>
    %94 = vector.broadcast %93 : vector<8x1xf32> to vector<8x8xf32>
    %95 = arith.subf %91, %94 : vector<8x8xf32>
    %96 = math.exp %95 : vector<8x8xf32>
    %cst_40 = arith.constant dense<0.000000e+00> : vector<8xf32>
    %97 = vector.multi_reduction <add>, %96, %cst_40 [1] : vector<8x8xf32> to vector<8xf32>
    %98 = vector.shape_cast %97 : vector<8xf32> to vector<8x1xf32>
    %99 = tpu.reciprocal %98 {approx = true} : vector<8x1xf32> -> vector<8x1xf32>
    %cst_41 = arith.constant dense<0.000000e+00> : vector<8x16xf32>
    %100 = tpu.matmul %96, %90, %cst_41 {dimension_numbers = #tpu.dot_dimension_numbers<[1], [0], [0], [1], [0, 0, 1, 1], [], []>} : vector<8x8xf32>, vector<8x16xf32>, vector<8x16xf32> -> vector<8x16xf32>
    %101 = vector.broadcast %99 : vector<8x1xf32> to vector<8x16xf32>
    %102 = arith.mulf %100, %101 : vector<8x16xf32>
    %103 = arith.addf %102, %19 : vector<8x16xf32>
    %c0_42 = arith.constant 0 : index
    %c0_43 = arith.constant 0 : index
    %104 = vector.load %arg14[%c0_42, %c0_43] : memref<16x1xf32, #tpu.memory_space<vmem>>, vector<16x1xf32>
    %cst_44 = arith.constant dense<0.000000e+00> : vector<8x1xf32>
    %105 = tpu.matmul %103, %104, %cst_44 {dimension_numbers = #tpu.dot_dimension_numbers<[1], [0], [0], [1], [0, 0, 1, 1], [], []>} : vector<8x16xf32>, vector<16x1xf32>, vector<8x1xf32> -> vector<8x1xf32>
    %c0_45 = arith.constant 0 : index
    %c0_46 = arith.constant 0 : index
    %106 = vector.load %arg15[%c0_45, %c0_46] : memref<1x1xf32, #tpu.memory_space<vmem>>, vector<1x1xf32>
    %107 = vector.broadcast %106 : vector<1x1xf32> to vector<8x1xf32>
    %108 = arith.addf %105, %107 : vector<8x1xf32>
    %c0_47 = arith.constant 0 : index
    %c0_48 = arith.constant 0 : index
    %109 = vector.load %arg16[%c0_47, %c0_48] : memref<8x1xf32, #tpu.memory_space<vmem>>, vector<8x1xf32>
    tpu.vector_store %arg16[%c0_47, %c0_48], %108 {strides = array<i32>} : memref<8x1xf32, #tpu.memory_space<vmem>>, vector<8x1xf32>,
    %c0_49 = arith.constant 0 : index
    %c0_50 = arith.constant 0 : index
    %110 = vector.load %arg17[%c0_49, %c0_50] : memref<8x16xf32, #tpu.memory_space<vmem>>, vector<8x16xf32>
    tpu.vector_store %arg17[%c0_49, %c0_50], %19 {strides = array<i32>} : memref<8x16xf32, #tpu.memory_space<vmem>>, vector<8x16xf32>,
    return
  }
}

</mosaic_0001>

<llo_original>
// kernel: tpu_custom_call.1
$region0: #{tpu_custom_call.1}
  #allocation0 [shape = 'u32[]', space=smem, size = 0x4, offset = 0x4, fixed_abs, tag = 'smem constant byte address 0x4 - core index']
  #allocation1 [shape = 'u32[144,128]{1,0:T(1,128)}', space=vmem, size = 0x12000, scoped, tag = 'internal scratch']
  #allocation2 [shape = 'f32[1,1]{1,0:T(1,128)S(1)}', space=vmem, size = 0x200, scoped, tag = 'scoped memory for tpu_custom_call.1']
  %s0 = inlined_call_operand.hbm [shape: f32[8,16], index: 0, kind: input, shape index: {}]
  %s1 = inlined_call_operand.vmem [shape: f32[8,1], index: 1, kind: input, shape index: {}]
  %s2 = inlined_call_operand.vmem [shape: f32[16,32], index: 2, kind: input, shape index: {}]
  %s3 = inlined_call_operand.hbm [shape: f32[1,32], index: 3, kind: input, shape index: {}]
  %s4 = inlined_call_operand.vmem [shape: f32[32,32], index: 4, kind: input, shape index: {}]
  %s5 = inlined_call_operand.hbm [shape: f32[1,32], index: 5, kind: input, shape index: {}]
  %s6 = inlined_call_operand.vmem [shape: f32[32,16], index: 6, kind: input, shape index: {}]
  %s7 = inlined_call_operand.hbm [shape: f32[1,16], index: 7, kind: input, shape index: {}]
  %s8 = inlined_call_operand.hbm [shape: f32[8,16], index: 8, kind: input, shape index: {}]
  %s9 = inlined_call_operand.hbm [shape: f32[1,16], index: 9, kind: input, shape index: {}]
  %s10 = inlined_call_operand.vmem [shape: f32[16,16], index: 10, kind: input, shape index: {}]
  %s11 = inlined_call_operand.hbm [shape: f32[1,16], index: 11, kind: input, shape index: {}]
  %s12 = inlined_call_operand.vmem [shape: f32[16,16], index: 12, kind: input, shape index: {}]
  %s13 = inlined_call_operand.vmem [shape: f32[1,16], index: 13, kind: input, shape index: {}]
  %s14 = inlined_call_operand.vmem [shape: f32[16,1], index: 14, kind: input, shape index: {}]
  %s15 = inlined_call_operand.<no memory space> [shape: f32[1,1], index: 15, kind: input, shape index: {}]
  %s16 = inlined_call_operand.vmem [shape: f32[8,1], index: 16, kind: output, shape index: {0}]
  %s17 = inlined_call_operand.hbm [shape: f32[8,16], index: 17, kind: output, shape index: {1}]
  %18 = xla_tuple %s16, %s17
  %s19 = sld [smem:[#allocation0]]
  $region110: #{tpu_custom_call.1} parent=0
    _
  %s21 = ssub.s32 1, %s19
  %s22 = scalar_select 0, %s21, %s19
  %v23 = vstv %s15
  %24 = vst [vmem:[#allocation2] sm:$0x1] %v23
  $region1: #{tpu_custom_call.1} parent=0
    #allocation3 [shape = 'u8[4096]{0}', space=vmem, size = 0x1000, scoped, tag = 'input window, operand 0, single buffered']
    #allocation4 [shape = 's32[1]{0}', space=sflag, size = 0x4, scoped, tag = 'scoped memory for tpu_custom_call.1']
    #allocation5 [shape = 's32[1]{0}', space=sflag, size = 0x4, scoped, tag = 'scoped memory for tpu_custom_call.1']
    #allocation6 [shape = 'u8[512]{0}', space=vmem, size = 0x400, scoped, tag = 'input window, operand 3, single buffered']
    #allocation7 [shape = 's32[1]{0}', space=sflag, size = 0x4, scoped, tag = 'scoped memory for tpu_custom_call.1']
    #allocation8 [shape = 'u8[512]{0}', space=vmem, size = 0x400, scoped, tag = 'input window, operand 5, single buffered']
    #allocation9 [shape = 'u8[512]{0}', space=vmem, size = 0x400, scoped, tag = 'input window, operand 7, single buffered']
    #allocation10 [shape = 's32[1]{0}', space=sflag, size = 0x4, scoped, tag = 'scoped memory for tpu_custom_call.1']
    #allocation11 [shape = 'u8[4096]{0}', space=vmem, size = 0x1000, scoped, tag = 'input window, operand 8, single buffered']
    #allocation12 [shape = 'u8[512]{0}', space=vmem, size = 0x400, scoped, tag = 'input window, operand 9, single buffered']
    #allocation13 [shape = 's32[1]{0}', space=sflag, size = 0x4, scoped, tag = 'scoped memory for tpu_custom_call.1']
    #allocation14 [shape = 'u8[512]{0}', space=vmem, size = 0x400, scoped, tag = 'input window, operand 11, single buffered']
    #allocation15 [shape = 'u8[4096]{0}', space=vmem, size = 0x1000, scoped, tag = 'output window, operand 1, single buffered']
    %25 = vsyncpa [#allocation4], 0
    %26 = vsyncpa [#allocation7], 0
    %27 = vsyncpa [#allocation10], 0
    %28 = vsyncpa [#allocation13], 0
    %29 = vsyncpa [#allocation5], 0
    // Predicated region
    $region2: #{tpu_custom_call.1} parent=1 // pred_check
      _
    $region3: #{tpu_custom_call.1} parent=1 // pred_check_branch
      %31 = sbr.rel (0) target = $region5
    $region4: #{tpu_custom_call.1} parent=1 // pred_region
      %s33 = ssub.s32 128, 128
      %34 = vsyncadd [#allocation4], %s33
      %s36 = sshll.u32 [#allocation3], 4
      %s37 = int_to_ptr.vmem [resolvable:$true] %s36
      %39 = dma.hbm_to_vmem [thread:$0]  %s0, 128, %s37, [#allocation4]
    $region5: #{tpu_custom_call.1} parent=1 // pred_fallthru
      _
    // Predicated region
    $region6: #{tpu_custom_call.1} parent=1 // pred_check
      _
    $region7: #{tpu_custom_call.1} parent=1 // pred_check_branch
      %41 = sbr.rel (0) target = $region9
    $region8: #{tpu_custom_call.1} parent=1 // pred_region
      _
    $region9: #{tpu_custom_call.1} parent=1 // pred_fallthru
      _
    // Predicated region
    $region10: #{tpu_custom_call.1} parent=1 // pred_check
      _
    $region11: #{tpu_custom_call.1} parent=1 // pred_check_branch
      %43 = sbr.rel (0) target = $region13
    $region12: #{tpu_custom_call.1} parent=1 // pred_region
      _
    $region13: #{tpu_custom_call.1} parent=1 // pred_fallthru
      _
    // Predicated region
    $region14: #{tpu_custom_call.1} parent=1 // pred_check
      _
    $region15: #{tpu_custom_call.1} parent=1 // pred_check_branch
      %45 = sbr.rel (0) target = $region17
    $region16: #{tpu_custom_call.1} parent=1 // pred_region
      %s47 = ssub.s32 16, 16
      %48 = vsyncadd [#allocation7], %s47
      %s50 = sshll.u32 [#allocation6], 4
      %s51 = int_to_ptr.vmem [resolvable:$true] %s50
      %53 = dma.hbm_to_vmem [thread:$0]  %s3, 16, %s51, [#allocation7]
    $region17: #{tpu_custom_call.1} parent=1 // pred_fallthru
      _
    // Predicated region
    $region18: #{tpu_custom_call.1} parent=1 // pred_check
      _
    $region19: #{tpu_custom_call.1} parent=1 // pred_check_branch
      %55 = sbr.rel (0) target = $region21
    $region20: #{tpu_custom_call.1} parent=1 // pred_region
      _
    $region21: #{tpu_custom_call.1} parent=1 // pred_fallthru
      _
    // Predicated region
    $region22: #{tpu_custom_call.1} parent=1 // pred_check
      _
    $region23: #{tpu_custom_call.1} parent=1 // pred_check_branch
      %57 = sbr.rel (0) target = $region25
    $region24: #{tpu_custom_call.1} parent=1 // pred_region
      %s59 = ssub.s32 16, 16
      %60 = vsyncadd [#allocation7], %s59
      %s62 = sshll.u32 [#allocation8], 4
      %s63 = int_to_ptr.vmem [resolvable:$true] %s62
      %65 = dma.hbm_to_vmem [thread:$0]  %s5, 16, %s63, [#allocation7]
    $region25: #{tpu_custom_call.1} parent=1 // pred_fallthru
      _
    // Predicated region
    $region26: #{tpu_custom_call.1} parent=1 // pred_check
      _
    $region27: #{tpu_custom_call.1} parent=1 // pred_check_branch
      %67 = sbr.rel (0) target = $region29
    $region28: #{tpu_custom_call.1} parent=1 // pred_region
      _
    $region29: #{tpu_custom_call.1} parent=1 // pred_fallthru
      _
    // Predicated region
    $region30: #{tpu_custom_call.1} parent=1 // pred_check
      _
    $region31: #{tpu_custom_call.1} parent=1 // pred_check_branch
      %69 = sbr.rel (0) target = $region33
    $region32: #{tpu_custom_call.1} parent=1 // pred_region
      %s71 = ssub.s32 16, 16
      %72 = vsyncadd [#allocation10], %s71
      %s74 = sshll.u32 [#allocation9], 4
      %s75 = int_to_ptr.vmem [resolvable:$true] %s74
      %77 = dma.hbm_to_vmem [thread:$0]  %s7, 16, %s75, [#allocation10]
    $region33: #{tpu_custom_call.1} parent=1 // pred_fallthru
      _
    // Predicated region
    $region34: #{tpu_custom_call.1} parent=1 // pred_check
      _
    $region35: #{tpu_custom_call.1} parent=1 // pred_check_branch
      %79 = sbr.rel (0) target = $region37
    $region36: #{tpu_custom_call.1} parent=1 // pred_region
      %s81 = ssub.s32 128, 128
      %82 = vsyncadd [#allocation10], %s81
      %s84 = sshll.u32 [#allocation11], 4
      %s85 = int_to_ptr.vmem [resolvable:$true] %s84
      %87 = dma.hbm_to_vmem [thread:$0]  %s8, 128, %s85, [#allocation10]
    $region37: #{tpu_custom_call.1} parent=1 // pred_fallthru
      _
    // Predicated region
    $region38: #{tpu_custom_call.1} parent=1 // pred_check
      _
    $region39: #{tpu_custom_call.1} parent=1 // pred_check_branch
      %89 = sbr.rel (0) target = $region41
    $region40: #{tpu_custom_call.1} parent=1 // pred_region
      %s91 = ssub.s32 16, 16
      %92 = vsyncadd [#allocation13], %s91
      %s94 = sshll.u32 [#allocation12], 4
      %s95 = int_to_ptr.vmem [resolvable:$true] %s94
      %97 = dma.hbm_to_vmem [thread:$0]  %s9, 16, %s95, [#allocation13]
    $region41: #{tpu_custom_call.1} parent=1 // pred_fallthru
      _
    // Predicated region
    $region42: #{tpu_custom_call.1} parent=1 // pred_check
      _
    $region43: #{tpu_custom_call.1} parent=1 // pred_check_branch
      %99 = sbr.rel (0) target = $region45
    $region44: #{tpu_custom_call.1} parent=1 // pred_region
      _
    $region45: #{tpu_custom_call.1} parent=1 // pred_fallthru
      _
    // Predicated region
    $region46: #{tpu_custom_call.1} parent=1 // pred_check
      _
    $region47: #{tpu_custom_call.1} parent=1 // pred_check_branch
      %101 = sbr.rel (0) target = $region49
    $region48: #{tpu_custom_call.1} parent=1 // pred_region
      %s103 = ssub.s32 16, 16
      %104 = vsyncadd [#allocation13], %s103
      %s106 = sshll.u32 [#allocation14], 4
      %s107 = int_to_ptr.vmem [resolvable:$true] %s106
      %109 = dma.hbm_to_vmem [thread:$0]  %s11, 16, %s107, [#allocation13]
    $region49: #{tpu_custom_call.1} parent=1 // pred_fallthru
      _
    // Predicated region
    $region50: #{tpu_custom_call.1} parent=1 // pred_check
      _
    $region51: #{tpu_custom_call.1} parent=1 // pred_check_branch
      %111 = sbr.rel (0) target = $region53
    $region52: #{tpu_custom_call.1} parent=1 // pred_region
      _
    $region53: #{tpu_custom_call.1} parent=1 // pred_fallthru
      _
    // Predicated region
    $region54: #{tpu_custom_call.1} parent=1 // pred_check
      _
    $region55: #{tpu_custom_call.1} parent=1 // pred_check_branch
      %113 = sbr.rel (0) target = $region57
    $region56: #{tpu_custom_call.1} parent=1 // pred_region
      _
    $region57: #{tpu_custom_call.1} parent=1 // pred_fallthru
      _
    // Predicated region
    $region58: #{tpu_custom_call.1} parent=1 // pred_check
      _
    $region59: #{tpu_custom_call.1} parent=1 // pred_check_branch
      %115 = sbr.rel (0) target = $region61
    $region60: #{tpu_custom_call.1} parent=1 // pred_region
      _
    $region61: #{tpu_custom_call.1} parent=1 // pred_fallthru
      _
    // Predicated region
    $region62: #{tpu_custom_call.1} parent=1 // pred_check
      _
    $region63: #{tpu_custom_call.1} parent=1 // pred_check_branch
      %117 = sbr.rel (0) target = $region65
    $region64: #{tpu_custom_call.1} parent=1 // pred_region
      _
    $region65: #{tpu_custom_call.1} parent=1 // pred_fallthru
      _
    // Predicated region
    $region66: #{tpu_custom_call.1} parent=1 // pred_check
      _
    $region67: #{tpu_custom_call.1} parent=1 // pred_check_branch
      %119 = sbr.rel (0) target = $region69
    $region68: #{tpu_custom_call.1} parent=1 // pred_region
      %120 = dma.done [#allocation4], 128
    $region69: #{tpu_custom_call.1} parent=1 // pred_fallthru
      _
    // Predicated region
    $region70: #{tpu_custom_call.1} parent=1 // pred_check
      _
    $region71: #{tpu_custom_call.1} parent=1 // pred_check_branch
      %122 = sbr.rel (0) target = $region73
    $region72: #{tpu_custom_call.1} parent=1 // pred_region
      %123 = dma.done [#allocation7], 16
    $region73: #{tpu_custom_call.1} parent=1 // pred_fallthru
      _
    // Predicated region
    $region74: #{tpu_custom_call.1} parent=1 // pred_check
      _
    $region75: #{tpu_custom_call.1} parent=1 // pred_check_branch
      %125 = sbr.rel (0) target = $region77
    $region76: #{tpu_custom_call.1} parent=1 // pred_region
      %126 = dma.done [#allocation7], 16
    $region77: #{tpu_custom_call.1} parent=1 // pred_fallthru
      _
    // Predicated region
    $region78: #{tpu_custom_call.1} parent=1 // pred_check
      _
    $region79: #{tpu_custom_call.1} parent=1 // pred_check_branch
      %128 = sbr.rel (0) target = $region81
    $region80: #{tpu_custom_call.1} parent=1 // pred_region
      %129 = dma.done [#allocation10], 16
    $region81: #{tpu_custom_call.1} parent=1 // pred_fallthru
      _
    // Predicated region
    $region82: #{tpu_custom_call.1} parent=1 // pred_check
      _
    $region83: #{tpu_custom_call.1} parent=1 // pred_check_branch
      %131 = sbr.rel (0) target = $region85
    $region84: #{tpu_custom_call.1} parent=1 // pred_region
      %132 = dma.done [#allocation10], 128
    $region85: #{tpu_custom_call.1} parent=1 // pred_fallthru
      _
    // Predicated region
    $region86: #{tpu_custom_call.1} parent=1 // pred_check
      _
    $region87: #{tpu_custom_call.1} parent=1 // pred_check_branch
      %134 = sbr.rel (0) target = $region89
    $region88: #{tpu_custom_call.1} parent=1 // pred_region
      %135 = dma.done [#allocation13], 16
    $region89: #{tpu_custom_call.1} parent=1 // pred_fallthru
      _
    // Predicated region
    $region90: #{tpu_custom_call.1} parent=1 // pred_check
      _
    $region91: #{tpu_custom_call.1} parent=1 // pred_check_branch
      %137 = sbr.rel (0) target = $region93
    $region92: #{tpu_custom_call.1} parent=1 // pred_region
      %138 = dma.done [#allocation13], 16
    $region93: #{tpu_custom_call.1} parent=1 // pred_fallthru
      _
    %v139 = vld [vmem:[#allocation3] sm:$0xff]
    %v140 = vld [vmem:[%s2] sm:$0xff]
    %v141 = vld [vmem:[%s2 + $0x8] sm:$0xff]
    %v142 = vld [vmem:[#allocation6] sm:$0x1]
    %v144 = vlaneseq
    %v145 = vshrl.u32 %v144, 7
    %v146 = vsub.s32 0, %v145
    %v147 = vrot.slane %v142, %v146
    %vm149 = vcmask 130048
    %v151 = vsel %vm149, %v139, 0
    %153 = vmatprep.subr.mxu0 0.0
    %154 = vmatpush1.msra.mxu0 0.0
    %155 = vmatprep.subr.mxu0 0.0
    %156 = vmatpush1.msra.mxu0 0.0
    %157 = vmatprep.subr.mxu0 0.0
    %158 = vmatpush1.msra.mxu0 0.0
    %159 = vmatprep.subr.mxu0 0.0
    %160 = vmatpush1.msra.mxu0 0.0
    %161 = vmatprep.subr.mxu0 0.0
    %162 = vmatpush1.msra.mxu0 0.0
    %163 = vmatprep.subr.mxu0 0.0
    %164 = vmatpush1.msra.mxu0 0.0
    %165 = vmatprep.subr.mxu0 0.0
    %166 = vmatpush1.msra.mxu0 0.0
    %167 = vmatprep.subr.mxu0 0.0
    %168 = vmatpush1.msra.mxu0 0.0
    %169 = vmatprep.subr.mxu0 0.0
    %170 = vmatpush1.msra.mxu0 0.0
    %171 = vmatprep.subr.mxu0 0.0
    %172 = vmatpush1.msra.mxu0 0.0
    %173 = vmatprep.subr.mxu0 0.0
    %174 = vmatpush1.msra.mxu0 0.0
    %175 = vmatprep.subr.mxu0 0.0
    %176 = vmatpush1.msra.mxu0 0.0
    %177 = vmatprep.subr.mxu0 0.0
    %178 = vmatpush1.msra.mxu0 0.0
    %179 = vmatprep.subr.mxu0 0.0
    %180 = vmatpush1.msra.mxu0 0.0
    %181 = vmatprep.subr.mxu0 0.0
    %182 = vmatpush1.msra.mxu0 %v141
    %183 = vmatprep.subr.mxu0 0.0
    %184 = vmatpush1.msra.mxu0 %v140
    %185 = vmatprep.subr.mxu0 0.0
    %186 = vmatpush2.msra.mxu0 0.0
    %187 = vmatprep.subr.mxu0 0.0
    %188 = vmatpush2.msra.mxu0 0.0
    %189 = vmatprep.subr.mxu0 0.0
    %190 = vmatpush2.msra.mxu0 0.0
    %191 = vmatprep.subr.mxu0 0.0
    %192 = vmatpush2.msra.mxu0 0.0
    %193 = vmatprep.subr.mxu0 0.0
    %194 = vmatpush2.msra.mxu0 0.0
    %195 = vmatprep.subr.mxu0 0.0
    %196 = vmatpush2.msra.mxu0 0.0
    %197 = vmatprep.subr.mxu0 0.0
    %198 = vmatpush2.msra.mxu0 0.0
    %199 = vmatprep.subr.mxu0 0.0
    %200 = vmatpush2.msra.mxu0 0.0
    %201 = vmatprep.subr.mxu0 0.0
    %202 = vmatpush2.msra.mxu0 0.0
    %203 = vmatprep.subr.mxu0 0.0
    %204 = vmatpush2.msra.mxu0 0.0
    %205 = vmatprep.subr.mxu0 0.0
    %206 = vmatpush2.msra.mxu0 0.0
    %207 = vmatprep.subr.mxu0 0.0
    %208 = vmatpush2.msra.mxu0 0.0
    %209 = vmatprep.subr.mxu0 0.0
    %210 = vmatpush2.msra.mxu0 0.0
    %211 = vmatprep.subr.mxu0 0.0
    %212 = vmatpush2.msra.mxu0 0.0
    %213 = vmatprep.subr.mxu0 0.0
    %214 = vmatpush2.msra.mxu0 0.0
    %215 = vmatprep.subr.mxu0 0.0
    %216 = vmatpush2.msra.mxu0 0.0
    %217 = vmatprep.mubr.f32.mxu0 0.0
    %218 = vmatmul.mubr.f32.gmra.mxu0 %v151
    %v219 = vpop.f32.mrf.mxu0
    %v220 = vadd.f32 %v147, %v219
    %v221 = vpop.f32.mrf.mxu0
    %222 = vdwg.mxu0
    %v223 = vmax.f32 %v220, 0.0
    %v224 = vld [vmem:[%s4] sm:$0xff]
    %v225 = vld [vmem:[%s4 + $0x8] sm:$0xff]
    %v226 = vld [vmem:[%s4 + $0x10] sm:$0xff]
    %v227 = vld [vmem:[%s4 + $0x18] sm:$0xff]
    %v228 = vld [vmem:[#allocation8] sm:$0x1]
    %v230 = vlaneseq
    %v231 = vshrl.u32 %v230, 7
    %v232 = vsub.s32 0, %v231
    %v233 = vrot.slane %v228, %v232
    %vm235 = vcmask 261120
    %v237 = vsel %vm235, %v223, 0
    %239 = vmatprep.subr.mxu0 0.0
    %240 = vmatpush1.msra.mxu0 0.0
    %241 = vmatprep.subr.mxu0 0.0
    %242 = vmatpush1.msra.mxu0 0.0
    %243 = vmatprep.subr.mxu0 0.0
    %244 = vmatpush1.msra.mxu0 0.0
    %245 = vmatprep.subr.mxu0 0.0
    %246 = vmatpush1.msra.mxu0 0.0
    %247 = vmatprep.subr.mxu0 0.0
    %248 = vmatpush1.msra.mxu0 0.0
    %249 = vmatprep.subr.mxu0 0.0
    %250 = vmatpush1.msra.mxu0 0.0
    %251 = vmatprep.subr.mxu0 0.0
    %252 = vmatpush1.msra.mxu0 0.0
    %253 = vmatprep.subr.mxu0 0.0
    %254 = vmatpush1.msra.mxu0 0.0
    %255 = vmatprep.subr.mxu0 0.0
    %256 = vmatpush1.msra.mxu0 0.0
    %257 = vmatprep.subr.mxu0 0.0
    %258 = vmatpush1.msra.mxu0 0.0
    %259 = vmatprep.subr.mxu0 0.0
    %260 = vmatpush1.msra.mxu0 0.0
    %261 = vmatprep.subr.mxu0 0.0
    %262 = vmatpush1.msra.mxu0 0.0
    %263 = vmatprep.subr.mxu0 0.0
    %264 = vmatpush1.msra.mxu0 %v227
    %265 = vmatprep.subr.mxu0 0.0
    %266 = vmatpush1.msra.mxu0 %v226
    %267 = vmatprep.subr.mxu0 0.0
    %268 = vmatpush1.msra.mxu0 %v225
    %269 = vmatprep.subr.mxu0 0.0
    %270 = vmatpush1.msra.mxu0 %v224
    %271 = vmatprep.subr.mxu0 0.0
    %272 = vmatpush2.msra.mxu0 0.0
    %273 = vmatprep.subr.mxu0 0.0
    %274 = vmatpush2.msra.mxu0 0.0
    %275 = vmatprep.subr.mxu0 0.0
    %276 = vmatpush2.msra.mxu0 0.0
    %277 = vmatprep.subr.mxu0 0.0
    %278 = vmatpush2.msra.mxu0 0.0
    %279 = vmatprep.subr.mxu0 0.0
    %280 = vmatpush2.msra.mxu0 0.0
    %281 = vmatprep.subr.mxu0 0.0
    %282 = vmatpush2.msra.mxu0 0.0
    %283 = vmatprep.subr.mxu0 0.0
    %284 = vmatpush2.msra.mxu0 0.0
    %285 = vmatprep.subr.mxu0 0.0
    %286 = vmatpush2.msra.mxu0 0.0
    %287 = vmatprep.subr.mxu0 0.0
    %288 = vmatpush2.msra.mxu0 0.0
    %289 = vmatprep.subr.mxu0 0.0
    %290 = vmatpush2.msra.mxu0 0.0
    %291 = vmatprep.subr.mxu0 0.0
    %292 = vmatpush2.msra.mxu0 0.0
    %293 = vmatprep.subr.mxu0 0.0
    %294 = vmatpush2.msra.mxu0 0.0
    %295 = vmatprep.subr.mxu0 0.0
    %296 = vmatpush2.msra.mxu0 0.0
    %297 = vmatprep.subr.mxu0 0.0
    %298 = vmatpush2.msra.mxu0 0.0
    %299 = vmatprep.subr.mxu0 0.0
    %300 = vmatpush2.msra.mxu0 0.0
    %301 = vmatprep.subr.mxu0 0.0
    %302 = vmatpush2.msra.mxu0 0.0
    %303 = vmatprep.mubr.f32.mxu0 0.0
    %304 = vmatmul.mubr.f32.gmra.mxu0 %v237
    %v305 = vpop.f32.mrf.mxu0
    %v306 = vadd.f32 %v233, %v305
    %v307 = vpop.f32.mrf.mxu0
    %308 = vdwg.mxu0
    %v309 = vmax.f32 %v306, 0.0
    %v310 = vld [vmem:[%s6] sm:$0xff]
    %v311 = vld [vmem:[%s6 + $0x8] sm:$0xff]
    %v312 = vld [vmem:[%s6 + $0x10] sm:$0xff]
    %v313 = vld [vmem:[%s6 + $0x18] sm:$0xff]
    %v314 = vld [vmem:[#allocation9] sm:$0x1]
    %v316 = vlaneseq
    %v317 = vshrl.u32 %v316, 7
    %v318 = vsub.s32 0, %v317
    %v319 = vrot.slane %v314, %v318
    %v322 = vsel %vm235, %v309, 0
    %324 = vmatprep.subr.mxu0 0.0
    %325 = vmatpush1.msra.mxu0 0.0
    %326 = vmatprep.subr.mxu0 0.0
    %327 = vmatpush1.msra.mxu0 0.0
    %328 = vmatprep.subr.mxu0 0.0
    %329 = vmatpush1.msra.mxu0 0.0
    %330 = vmatprep.subr.mxu0 0.0
    %331 = vmatpush1.msra.mxu0 0.0
    %332 = vmatprep.subr.mxu0 0.0
    %333 = vmatpush1.msra.mxu0 0.0
    %334 = vmatprep.subr.mxu0 0.0
    %335 = vmatpush1.msra.mxu0 0.0
    %336 = vmatprep.subr.mxu0 0.0
    %337 = vmatpush1.msra.mxu0 0.0
    %338 = vmatprep.subr.mxu0 0.0
    %339 = vmatpush1.msra.mxu0 0.0
    %340 = vmatprep.subr.mxu0 0.0
    %341 = vmatpush1.msra.mxu0 0.0
    %342 = vmatprep.subr.mxu0 0.0
    %343 = vmatpush1.msra.mxu0 0.0
    %344 = vmatprep.subr.mxu0 0.0
    %345 = vmatpush1.msra.mxu0 0.0
    %346 = vmatprep.subr.mxu0 0.0
    %347 = vmatpush1.msra.mxu0 0.0
    %348 = vmatprep.subr.mxu0 0.0
    %349 = vmatpush1.msra.mxu0 %v313
    %350 = vmatprep.subr.mxu0 0.0
    %351 = vmatpush1.msra.mxu0 %v312
    %352 = vmatprep.subr.mxu0 0.0
    %353 = vmatpush1.msra.mxu0 %v311
    %354 = vmatprep.subr.mxu0 0.0
    %355 = vmatpush1.msra.mxu0 %v310
    %356 = vmatprep.subr.mxu0 0.0
    %357 = vmatpush2.msra.mxu0 0.0
    %358 = vmatprep.subr.mxu0 0.0
    %359 = vmatpush2.msra.mxu0 0.0
    %360 = vmatprep.subr.mxu0 0.0
    %361 = vmatpush2.msra.mxu0 0.0
    %362 = vmatprep.subr.mxu0 0.0
    %363 = vmatpush2.msra.mxu0 0.0
    %364 = vmatprep.subr.mxu0 0.0
    %365 = vmatpush2.msra.mxu0 0.0
    %366 = vmatprep.subr.mxu0 0.0
    %367 = vmatpush2.msra.mxu0 0.0
    %368 = vmatprep.subr.mxu0 0.0
    %369 = vmatpush2.msra.mxu0 0.0
    %370 = vmatprep.subr.mxu0 0.0
    %371 = vmatpush2.msra.mxu0 0.0
    %372 = vmatprep.subr.mxu0 0.0
    %373 = vmatpush2.msra.mxu0 0.0
    %374 = vmatprep.subr.mxu0 0.0
    %375 = vmatpush2.msra.mxu0 0.0
    %376 = vmatprep.subr.mxu0 0.0
    %377 = vmatpush2.msra.mxu0 0.0
    %378 = vmatprep.subr.mxu0 0.0
    %379 = vmatpush2.msra.mxu0 0.0
    %380 = vmatprep.subr.mxu0 0.0
    %381 = vmatpush2.msra.mxu0 0.0
    %382 = vmatprep.subr.mxu0 0.0
    %383 = vmatpush2.msra.mxu0 0.0
    %384 = vmatprep.subr.mxu0 0.0
    %385 = vmatpush2.msra.mxu0 0.0
    %386 = vmatprep.subr.mxu0 0.0
    %387 = vmatpush2.msra.mxu0 0.0
    %388 = vmatprep.mubr.f32.mxu0 0.0
    %389 = vmatmul.mubr.f32.gmra.mxu0 %v322
    %v390 = vpop.f32.mrf.mxu0
    %v391 = vadd.f32 %v319, %v390
    %v392 = vpop.f32.mrf.mxu0
    %393 = vdwg.mxu0
    %v394 = vld [vmem:[%s1] sm:$0xff]
    %v395 = vld [vmem:[#allocation11] sm:$0xff]
    %v396 = vld [vmem:[#allocation12] sm:$0x1]
    %v397 = vadd.f32 %v396, %v395
    %399 = vset.pattern.permute.xlu0 0
    %400 = vperm.xlu0 %399, %v394
    %v401 = vpop.permute.xlu0 %400
    %v403 = vlaneseq
    %v404 = vshrl.u32 %v403, 7
    %v405 = vsub.s32 1, %v404
    %v406 = vrot.slane %v395, %v405
    %v407 = vmul.f32 %v401, %v406
    %v409 = vlaneseq
    %v410 = vshrl.u32 %v409, 7
    %v411 = vsub.s32 0, %v410
    %v412 = vrot.slane %v397, %v411
    %v414 = vadd.f32 %v412, %v407
    %v415 = vmul.f32 %v394, %v394
    %417 = vset.pattern.permute.xlu0 0
    %418 = vperm.xlu0 %417, %v415
    %v419 = vpop.permute.xlu0 %418
    %v421 = vlaneseq
    %v422 = vshrl.u32 %v421, 7
    %v423 = vsub.s32 2, %v422
    %v424 = vrot.slane %v395, %v423
    %v425 = vmul.f32 %v419, %v424
    %v426 = vadd.f32 %v414, %v425
    %v427 = vmul.f32 %v415, %v394
    %429 = vset.pattern.permute.xlu0 0
    %430 = vperm.xlu0 %429, %v427
    %v431 = vpop.permute.xlu0 %430
    %v433 = vlaneseq
    %v434 = vshrl.u32 %v433, 7
    %v435 = vsub.s32 3, %v434
    %v436 = vrot.slane %v395, %v435
    %v437 = vmul.f32 %v431, %v436
    %v438 = vadd.f32 %v426, %v437
    %v439 = vmul.f32 %v427, %v394
    %441 = vset.pattern.permute.xlu0 0
    %442 = vperm.xlu0 %441, %v439
    %v443 = vpop.permute.xlu0 %442
    %v445 = vlaneseq
    %v446 = vshrl.u32 %v445, 7
    %v447 = vsub.s32 4, %v446
    %v448 = vrot.slane %v395, %v447
    %v449 = vmul.f32 %v443, %v448
    %v450 = vadd.f32 %v438, %v449
    %v451 = vmul.f32 %v439, %v394
    %453 = vset.pattern.permute.xlu0 0
    %454 = vperm.xlu0 %453, %v451
    %v455 = vpop.permute.xlu0 %454
    %v457 = vlaneseq
    %v458 = vshrl.u32 %v457, 7
    %v459 = vsub.s32 5, %v458
    %v460 = vrot.slane %v395, %v459
    %v461 = vmul.f32 %v455, %v460
    %v462 = vadd.f32 %v450, %v461
    %v463 = vsub.f32 %v394, 0.33333334
    %v464 = vmax.f32 %v463, 0.0
    %v465 = vmul.f32 %v464, %v464
    %v466 = vmul.f32 %v465, %v465
    %v467 = vmul.f32 %v464, %v466
    %469 = vset.pattern.permute.xlu0 0
    %470 = vperm.xlu0 %469, %v467
    %v471 = vpop.permute.xlu0 %470
    %v473 = vlaneseq
    %v474 = vshrl.u32 %v473, 7
    %v475 = vsub.s32 6, %v474
    %v476 = vrot.slane %v395, %v475
    %v477 = vmul.f32 %v471, %v476
    %v478 = vadd.f32 %v462, %v477
    %v479 = vsub.f32 %v394, 0.6666667
    %v480 = vmax.f32 %v479, 0.0
    %v481 = vmul.f32 %v480, %v480
    %v482 = vmul.f32 %v481, %v481
    %v483 = vmul.f32 %v480, %v482
    %485 = vset.pattern.permute.xlu0 0
    %486 = vperm.xlu0 %485, %v483
    %v487 = vpop.permute.xlu0 %486
    %v489 = vlaneseq
    %v490 = vshrl.u32 %v489, 7
    %v491 = vsub.s32 7, %v490
    %v492 = vrot.slane %v395, %v491
    %v493 = vmul.f32 %v487, %v492
    %v494 = vadd.f32 %v478, %v493
    %v495 = vmul.f32 %v494, 0.25
    %v496 = vld [vmem:[%s10] sm:$0xff]
    %v497 = vld [vmem:[%s10 + $0x8] sm:$0xff]
    %v498 = vld [vmem:[#allocation14] sm:$0x1]
    %v500 = vlaneseq
    %v501 = vshrl.u32 %v500, 7
    %v502 = vsub.s32 0, %v501
    %v503 = vrot.slane %v498, %v502
    %v506 = vsel %vm149, %v391, 0
    %508 = vmatprep.subr.mxu0 0.0
    %509 = vmatpush1.msra.mxu0 0.0
    %510 = vmatprep.subr.mxu0 0.0
    %511 = vmatpush1.msra.mxu0 0.0
    %512 = vmatprep.subr.mxu0 0.0
    %513 = vmatpush1.msra.mxu0 0.0
    %514 = vmatprep.subr.mxu0 0.0
    %515 = vmatpush1.msra.mxu0 0.0
    %516 = vmatprep.subr.mxu0 0.0
    %517 = vmatpush1.msra.mxu0 0.0
    %518 = vmatprep.subr.mxu0 0.0
    %519 = vmatpush1.msra.mxu0 0.0
    %520 = vmatprep.subr.mxu0 0.0
    %521 = vmatpush1.msra.mxu0 0.0
    %522 = vmatprep.subr.mxu0 0.0
    %523 = vmatpush1.msra.mxu0 0.0
    %524 = vmatprep.subr.mxu0 0.0
    %525 = vmatpush1.msra.mxu0 0.0
    %526 = vmatprep.subr.mxu0 0.0
    %527 = vmatpush1.msra.mxu0 0.0
    %528 = vmatprep.subr.mxu0 0.0
    %529 = vmatpush1.msra.mxu0 0.0
    %530 = vmatprep.subr.mxu0 0.0
    %531 = vmatpush1.msra.mxu0 0.0
    %532 = vmatprep.subr.mxu0 0.0
    %533 = vmatpush1.msra.mxu0 0.0
    %534 = vmatprep.subr.mxu0 0.0
    %535 = vmatpush1.msra.mxu0 0.0
    %536 = vmatprep.subr.mxu0 0.0
    %537 = vmatpush1.msra.mxu0 %v497
    %538 = vmatprep.subr.mxu0 0.0
    %539 = vmatpush1.msra.mxu0 %v496
    %540 = vmatprep.subr.mxu0 0.0
    %541 = vmatpush2.msra.mxu0 0.0
    %542 = vmatprep.subr.mxu0 0.0
    %543 = vmatpush2.msra.mxu0 0.0
    %544 = vmatprep.subr.mxu0 0.0
    %545 = vmatpush2.msra.mxu0 0.0
    %546 = vmatprep.subr.mxu0 0.0
    %547 = vmatpush2.msra.mxu0 0.0
    %548 = vmatprep.subr.mxu0 0.0
    %549 = vmatpush2.msra.mxu0 0.0
    %550 = vmatprep.subr.mxu0 0.0
    %551 = vmatpush2.msra.mxu0 0.0
    %552 = vmatprep.subr.mxu0 0.0
    %553 = vmatpush2.msra.mxu0 0.0
    %554 = vmatprep.subr.mxu0 0.0
    %555 = vmatpush2.msra.mxu0 0.0
    %556 = vmatprep.subr.mxu0 0.0
    %557 = vmatpush2.msra.mxu0 0.0
    %558 = vmatprep.subr.mxu0 0.0
    %559 = vmatpush2.msra.mxu0 0.0
    %560 = vmatprep.subr.mxu0 0.0
    %561 = vmatpush2.msra.mxu0 0.0
    %562 = vmatprep.subr.mxu0 0.0
    %563 = vmatpush2.msra.mxu0 0.0
    %564 = vmatprep.subr.mxu0 0.0
    %565 = vmatpush2.msra.mxu0 0.0
    %566 = vmatprep.subr.mxu0 0.0
    %567 = vmatpush2.msra.mxu0 0.0
    %568 = vmatprep.subr.mxu0 0.0
    %569 = vmatpush2.msra.mxu0 0.0
    %570 = vmatprep.subr.mxu0 0.0
    %571 = vmatpush2.msra.mxu0 0.0
    %572 = vmatprep.mubr.f32.mxu0 0.0
    %573 = vmatmul.mubr.f32.gmra.mxu0 %v506
    %v574 = vpop.f32.mrf.mxu0
    %v575 = vadd.f32 %v503, %v574
    %v576 = vpop.f32.mrf.mxu0
    %577 = vdwg.mxu0
    %v578 = vld [vmem:[%s12] sm:$0xff]
    %v579 = vld [vmem:[%s12 + $0x8] sm:$0xff]
    %v580 = vld [vmem:[%s13] sm:$0x1]
    %v582 = vlaneseq
    %v583 = vshrl.u32 %v582, 7
    %v584 = vsub.s32 0, %v583
    %v585 = vrot.slane %v580, %v584
    %587 = vmatprep.subr.mxu0 0.0
    %588 = vmatpush1.msra.mxu0 0.0
    %589 = vmatprep.subr.mxu0 0.0
    %590 = vmatpush1.msra.mxu0 0.0
    %591 = vmatprep.subr.mxu0 0.0
    %592 = vmatpush1.msra.mxu0 0.0
    %593 = vmatprep.subr.mxu0 0.0
    %594 = vmatpush1.msra.mxu0 0.0
    %595 = vmatprep.subr.mxu0 0.0
    %596 = vmatpush1.msra.mxu0 0.0
    %597 = vmatprep.subr.mxu0 0.0
    %598 = vmatpush1.msra.mxu0 0.0
    %599 = vmatprep.subr.mxu0 0.0
    %600 = vmatpush1.msra.mxu0 0.0
    %601 = vmatprep.subr.mxu0 0.0
    %602 = vmatpush1.msra.mxu0 0.0
    %603 = vmatprep.subr.mxu0 0.0
    %604 = vmatpush1.msra.mxu0 0.0
    %605 = vmatprep.subr.mxu0 0.0
    %606 = vmatpush1.msra.mxu0 0.0
    %607 = vmatprep.subr.mxu0 0.0
    %608 = vmatpush1.msra.mxu0 0.0
    %609 = vmatprep.subr.mxu0 0.0
    %610 = vmatpush1.msra.mxu0 0.0
    %611 = vmatprep.subr.mxu0 0.0
    %612 = vmatpush1.msra.mxu0 0.0
    %613 = vmatprep.subr.mxu0 0.0
    %614 = vmatpush1.msra.mxu0 0.0
    %615 = vmatprep.subr.mxu0 0.0
    %616 = vmatpush1.msra.mxu0 %v579
    %617 = vmatprep.subr.mxu0 0.0
    %618 = vmatpush1.msra.mxu0 %v578
    %619 = vmatprep.subr.mxu0 0.0
    %620 = vmatpush2.msra.mxu0 0.0
    %621 = vmatprep.subr.mxu0 0.0
    %622 = vmatpush2.msra.mxu0 0.0
    %623 = vmatprep.subr.mxu0 0.0
    %624 = vmatpush2.msra.mxu0 0.0
    %625 = vmatprep.subr.mxu0 0.0
    %626 = vmatpush2.msra.mxu0 0.0
    %627 = vmatprep.subr.mxu0 0.0
    %628 = vmatpush2.msra.mxu0 0.0
    %629 = vmatprep.subr.mxu0 0.0
    %630 = vmatpush2.msra.mxu0 0.0
    %631 = vmatprep.subr.mxu0 0.0
    %632 = vmatpush2.msra.mxu0 0.0
    %633 = vmatprep.subr.mxu0 0.0
    %634 = vmatpush2.msra.mxu0 0.0
    %635 = vmatprep.subr.mxu0 0.0
    %636 = vmatpush2.msra.mxu0 0.0
    %637 = vmatprep.subr.mxu0 0.0
    %638 = vmatpush2.msra.mxu0 0.0
    %639 = vmatprep.subr.mxu0 0.0
    %640 = vmatpush2.msra.mxu0 0.0
    %641 = vmatprep.subr.mxu0 0.0
    %642 = vmatpush2.msra.mxu0 0.0
    %643 = vmatprep.subr.mxu0 0.0
    %644 = vmatpush2.msra.mxu0 0.0
    %645 = vmatprep.subr.mxu0 0.0
    %646 = vmatpush2.msra.mxu0 0.0
    %647 = vmatprep.subr.mxu0 0.0
    %648 = vmatpush2.msra.mxu0 0.0
    %649 = vmatprep.subr.mxu0 0.0
    %650 = vmatpush2.msra.mxu0 0.0
    %651 = vmatprep.mubr.f32.mxu0 0.0
    %652 = vmatmul.mubr.f32.gmra.mxu0 %v506
    %v653 = vpop.f32.mrf.mxu0
    %v654 = vadd.f32 %v585, %v653
    %v655 = vpop.f32.mrf.mxu0
    %656 = vdwg.mxu0
    %v658 = vsel %vm149, %v495, 0
    %v661 = vsel %vm149, %v575, 0
    %663 = vmatprep.subr.mxu0 0.0
    %664 = vmatpush1.xpose.msra.mxu0 0.0
    %665 = vmatprep.subr.mxu0 0.0
    %666 = vmatpush1.xpose.msra.mxu0 0.0
    %667 = vmatprep.subr.mxu0 0.0
    %668 = vmatpush1.xpose.msra.mxu0 0.0
    %669 = vmatprep.subr.mxu0 0.0
    %670 = vmatpush1.xpose.msra.mxu0 0.0
    %671 = vmatprep.subr.mxu0 0.0
    %672 = vmatpush1.xpose.msra.mxu0 0.0
    %673 = vmatprep.subr.mxu0 0.0
    %674 = vmatpush1.xpose.msra.mxu0 0.0
    %675 = vmatprep.subr.mxu0 0.0
    %676 = vmatpush1.xpose.msra.mxu0 0.0
    %677 = vmatprep.subr.mxu0 0.0
    %678 = vmatpush1.xpose.msra.mxu0 0.0
    %679 = vmatprep.subr.mxu0 0.0
    %680 = vmatpush1.xpose.msra.mxu0 0.0
    %681 = vmatprep.subr.mxu0 0.0
    %682 = vmatpush1.xpose.msra.mxu0 0.0
    %683 = vmatprep.subr.mxu0 0.0
    %684 = vmatpush1.xpose.msra.mxu0 0.0
    %685 = vmatprep.subr.mxu0 0.0
    %686 = vmatpush1.xpose.msra.mxu0 0.0
    %687 = vmatprep.subr.mxu0 0.0
    %688 = vmatpush1.xpose.msra.mxu0 0.0
    %689 = vmatprep.subr.mxu0 0.0
    %690 = vmatpush1.xpose.msra.mxu0 0.0
    %691 = vmatprep.subr.mxu0 0.0
    %692 = vmatpush1.xpose.msra.mxu0 0.0
    %693 = vmatprep.subr.mxu0 0.0
    %694 = vmatpush1.xpose.msra.mxu0 %v661
    %695 = vmatprep.subr.mxu0 0.0
    %696 = vmatpush2.xpose.msra.mxu0 0.0
    %697 = vmatprep.subr.mxu0 0.0
    %698 = vmatpush2.xpose.msra.mxu0 0.0
    %699 = vmatprep.subr.mxu0 0.0
    %700 = vmatpush2.xpose.msra.mxu0 0.0
    %701 = vmatprep.subr.mxu0 0.0
    %702 = vmatpush2.xpose.msra.mxu0 0.0
    %703 = vmatprep.subr.mxu0 0.0
    %704 = vmatpush2.xpose.msra.mxu0 0.0
    %705 = vmatprep.subr.mxu0 0.0
    %706 = vmatpush2.xpose.msra.mxu0 0.0
    %707 = vmatprep.subr.mxu0 0.0
    %708 = vmatpush2.xpose.msra.mxu0 0.0
    %709 = vmatprep.subr.mxu0 0.0
    %710 = vmatpush2.xpose.msra.mxu0 0.0
    %711 = vmatprep.subr.mxu0 0.0
    %712 = vmatpush2.xpose.msra.mxu0 0.0
    %713 = vmatprep.subr.mxu0 0.0
    %714 = vmatpush2.xpose.msra.mxu0 0.0
    %715 = vmatprep.subr.mxu0 0.0
    %716 = vmatpush2.xpose.msra.mxu0 0.0
    %717 = vmatprep.subr.mxu0 0.0
    %718 = vmatpush2.xpose.msra.mxu0 0.0
    %719 = vmatprep.subr.mxu0 0.0
    %720 = vmatpush2.xpose.msra.mxu0 0.0
    %721 = vmatprep.subr.mxu0 0.0
    %722 = vmatpush2.xpose.msra.mxu0 0.0
    %723 = vmatprep.subr.mxu0 0.0
    %724 = vmatpush2.xpose.msra.mxu0 0.0
    %725 = vmatprep.subr.mxu0 0.0
    %726 = vmatpush2.xpose.msra.mxu0 0.0
    %727 = vmatprep.mubr.f32.mxu0 0.0
    %728 = vmatmul.mubr.f32.gmra.mxu0 %v658
    %v729 = vpop.f32.mrf.mxu0
    %v730 = vadd.f32 0.0, %v729
    %v731 = vpop.f32.mrf.mxu0
    %732 = vdwg.mxu0
    %vm733 = vcmask 64512
    %v734 = vsel %vm733, %v730, -inf
    %735 = vmax.xlane.f32.xlu0 %v734
    %v736 = vpop.xlane.xlu0 %735
    %v737 = vsub.f32 %v730, %v736
    %v738 = vmul.f32 %v737, 1.442695
    %v739 = vpow.pop %v738
    %v740 = vsel %vm733, %v739, 0.0
    %741 = vadd.xlane.f32.xlu0 %v740
    %v742 = vpop.xlane.xlu0 %741
    %v743 = vrcp.pop %v742
    %v745 = vsel %vm733, %v739, 0
    %747 = vmatprep.subr.mxu0 0.0
    %748 = vmatpush1.msra.mxu0 0.0
    %749 = vmatprep.subr.mxu0 0.0
    %750 = vmatpush1.msra.mxu0 0.0
    %751 = vmatprep.subr.mxu0 0.0
    %752 = vmatpush1.msra.mxu0 0.0
    %753 = vmatprep.subr.mxu0 0.0
    %754 = vmatpush1.msra.mxu0 0.0
    %755 = vmatprep.subr.mxu0 0.0
    %756 = vmatpush1.msra.mxu0 0.0
    %757 = vmatprep.subr.mxu0 0.0
    %758 = vmatpush1.msra.mxu0 0.0
    %759 = vmatprep.subr.mxu0 0.0
    %760 = vmatpush1.msra.mxu0 0.0
    %761 = vmatprep.subr.mxu0 0.0
    %762 = vmatpush1.msra.mxu0 0.0
    %763 = vmatprep.subr.mxu0 0.0
    %764 = vmatpush1.msra.mxu0 0.0
    %765 = vmatprep.subr.mxu0 0.0
    %766 = vmatpush1.msra.mxu0 0.0
    %767 = vmatprep.subr.mxu0 0.0
    %768 = vmatpush1.msra.mxu0 0.0
    %769 = vmatprep.subr.mxu0 0.0
    %770 = vmatpush1.msra.mxu0 0.0
    %771 = vmatprep.subr.mxu0 0.0
    %772 = vmatpush1.msra.mxu0 0.0
    %773 = vmatprep.subr.mxu0 0.0
    %774 = vmatpush1.msra.mxu0 0.0
    %775 = vmatprep.subr.mxu0 0.0
    %776 = vmatpush1.msra.mxu0 0.0
    %777 = vmatprep.subr.mxu0 0.0
    %778 = vmatpush1.msra.mxu0 %v654
    %779 = vmatprep.subr.mxu0 0.0
    %780 = vmatpush2.msra.mxu0 0.0
    %781 = vmatprep.subr.mxu0 0.0
    %782 = vmatpush2.msra.mxu0 0.0
    %783 = vmatprep.subr.mxu0 0.0
    %784 = vmatpush2.msra.mxu0 0.0
    %785 = vmatprep.subr.mxu0 0.0
    %786 = vmatpush2.msra.mxu0 0.0
    %787 = vmatprep.subr.mxu0 0.0
    %788 = vmatpush2.msra.mxu0 0.0
    %789 = vmatprep.subr.mxu0 0.0
    %790 = vmatpush2.msra.mxu0 0.0
    %791 = vmatprep.subr.mxu0 0.0
    %792 = vmatpush2.msra.mxu0 0.0
    %793 = vmatprep.subr.mxu0 0.0
    %794 = vmatpush2.msra.mxu0 0.0
    %795 = vmatprep.subr.mxu0 0.0
    %796 = vmatpush2.msra.mxu0 0.0
    %797 = vmatprep.subr.mxu0 0.0
    %798 = vmatpush2.msra.mxu0 0.0
    %799 = vmatprep.subr.mxu0 0.0
    %800 = vmatpush2.msra.mxu0 0.0
    %801 = vmatprep.subr.mxu0 0.0
    %802 = vmatpush2.msra.mxu0 0.0
    %803 = vmatprep.subr.mxu0 0.0
    %804 = vmatpush2.msra.mxu0 0.0
    %805 = vmatprep.subr.mxu0 0.0
    %806 = vmatpush2.msra.mxu0 0.0
    %807 = vmatprep.subr.mxu0 0.0
    %808 = vmatpush2.msra.mxu0 0.0
    %809 = vmatprep.subr.mxu0 0.0
    %810 = vmatpush2.msra.mxu0 0.0
    %811 = vmatprep.mubr.f32.mxu0 0.0
    %812 = vmatmul.mubr.f32.gmra.mxu0 %v745
    %v813 = vpop.f32.mrf.mxu0
    %v814 = vadd.f32 0.0, %v813
    %v815 = vpop.f32.mrf.mxu0
    %816 = vdwg.mxu0
    %v817 = vmul.f32 %v814, %v743
    %v818 = vadd.f32 %v817, %v391
    %v819 = vld [vmem:[%s14] sm:$0xff]
    %v820 = vld [vmem:[%s14 + $0x8] sm:$0xff]
    %v821 = vld [vmem:[#allocation2] sm:$0x1]
    %v823 = vlaneseq
    %v824 = vshrl.u32 %v823, 7
    %v825 = vsub.s32 0, %v824
    %v826 = vrot.slane %v821, %v825
    %v829 = vsel %vm149, %v818, 0
    %831 = vmatprep.subr.mxu0 0.0
    %832 = vmatpush1.msra.mxu0 0.0
    %833 = vmatprep.subr.mxu0 0.0
    %834 = vmatpush1.msra.mxu0 0.0
    %835 = vmatprep.subr.mxu0 0.0
    %836 = vmatpush1.msra.mxu0 0.0
    %837 = vmatprep.subr.mxu0 0.0
    %838 = vmatpush1.msra.mxu0 0.0
    %839 = vmatprep.subr.mxu0 0.0
    %840 = vmatpush1.msra.mxu0 0.0
    %841 = vmatprep.subr.mxu0 0.0
    %842 = vmatpush1.msra.mxu0 0.0
    %843 = vmatprep.subr.mxu0 0.0
    %844 = vmatpush1.msra.mxu0 0.0
    %845 = vmatprep.subr.mxu0 0.0
    %846 = vmatpush1.msra.mxu0 0.0
    %847 = vmatprep.subr.mxu0 0.0
    %848 = vmatpush1.msra.mxu0 0.0
    %849 = vmatprep.subr.mxu0 0.0
    %850 = vmatpush1.msra.mxu0 0.0
    %851 = vmatprep.subr.mxu0 0.0
    %852 = vmatpush1.msra.mxu0 0.0
    %853 = vmatprep.subr.mxu0 0.0
    %854 = vmatpush1.msra.mxu0 0.0
    %855 = vmatprep.subr.mxu0 0.0
    %856 = vmatpush1.msra.mxu0 0.0
    %857 = vmatprep.subr.mxu0 0.0
    %858 = vmatpush1.msra.mxu0 0.0
    %859 = vmatprep.subr.mxu0 0.0
    %860 = vmatpush1.msra.mxu0 %v820
    %861 = vmatprep.subr.mxu0 0.0
    %862 = vmatpush1.msra.mxu0 %v819
    %863 = vmatprep.subr.mxu0 0.0
    %864 = vmatpush2.msra.mxu0 0.0
    %865 = vmatprep.subr.mxu0 0.0
    %866 = vmatpush2.msra.mxu0 0.0
    %867 = vmatprep.subr.mxu0 0.0
    %868 = vmatpush2.msra.mxu0 0.0
    %869 = vmatprep.subr.mxu0 0.0
    %870 = vmatpush2.msra.mxu0 0.0
    %871 = vmatprep.subr.mxu0 0.0
    %872 = vmatpush2.msra.mxu0 0.0
    %873 = vmatprep.subr.mxu0 0.0
    %874 = vmatpush2.msra.mxu0 0.0
    %875 = vmatprep.subr.mxu0 0.0
    %876 = vmatpush2.msra.mxu0 0.0
    %877 = vmatprep.subr.mxu0 0.0
    %878 = vmatpush2.msra.mxu0 0.0
    %879 = vmatprep.subr.mxu0 0.0
    %880 = vmatpush2.msra.mxu0 0.0
    %881 = vmatprep.subr.mxu0 0.0
    %882 = vmatpush2.msra.mxu0 0.0
    %883 = vmatprep.subr.mxu0 0.0
    %884 = vmatpush2.msra.mxu0 0.0
    %885 = vmatprep.subr.mxu0 0.0
    %886 = vmatpush2.msra.mxu0 0.0
    %887 = vmatprep.subr.mxu0 0.0
    %888 = vmatpush2.msra.mxu0 0.0
    %889 = vmatprep.subr.mxu0 0.0
    %890 = vmatpush2.msra.mxu0 0.0
    %891 = vmatprep.subr.mxu0 0.0
    %892 = vmatpush2.msra.mxu0 0.0
    %893 = vmatprep.subr.mxu0 0.0
    %894 = vmatpush2.msra.mxu0 0.0
    %895 = vmatprep.mubr.f32.mxu0 0.0
    %896 = vmatmul.mubr.f32.gmra.mxu0 %v829
    %v897 = vpop.f32.mrf.mxu0
    %v898 = vadd.f32 %v826, %v897
    %v899 = vpop.f32.mrf.mxu0
    %900 = vdwg.mxu0
    %vm901 = vcmask 7168
    %902 = vst.msk [vmem:[%s16] sm:$0xff] %vm901, %v898
    %903 = vst.msk [vmem:[#allocation15] sm:$0xff] %vm149, %v391
    // Predicated region
    $region94: #{tpu_custom_call.1} parent=1 // pred_check
      _
    $region95: #{tpu_custom_call.1} parent=1 // pred_check_branch
      %905 = sbr.rel (0) target = $region97
    $region96: #{tpu_custom_call.1} parent=1 // pred_region
      _
    $region97: #{tpu_custom_call.1} parent=1 // pred_fallthru
      _
    // Predicated region
    $region98: #{tpu_custom_call.1} parent=1 // pred_check
      _
    $region99: #{tpu_custom_call.1} parent=1 // pred_check_branch
      %907 = sbr.rel (0) target = $region101
    $region100: #{tpu_custom_call.1} parent=1 // pred_region
      %s909 = ssub.s32 128, 128
      %910 = vsyncadd [#allocation5], %s909
      %s912 = sshll.u32 [#allocation15], 4
      %s913 = int_to_ptr.vmem [resolvable:$true] %s912
      %915 = dma.vmem_to_hbm [thread:$0]  %s913, 128, %s17, [#allocation5]
    $region101: #{tpu_custom_call.1} parent=1 // pred_fallthru
      _
    // Predicated region
    $region102: #{tpu_custom_call.1} parent=1 // pred_check
      _
    $region103: #{tpu_custom_call.1} parent=1 // pred_check_branch
      %917 = sbr.rel (0) target = $region105
    $region104: #{tpu_custom_call.1} parent=1 // pred_region
      _
    $region105: #{tpu_custom_call.1} parent=1 // pred_fallthru
      _
    // Predicated region
    $region106: #{tpu_custom_call.1} parent=1 // pred_check
      _
    $region107: #{tpu_custom_call.1} parent=1 // pred_check_branch
      %919 = sbr.rel (0) target = $region109
    $region108: #{tpu_custom_call.1} parent=1 // pred_region
      %920 = dma.done [#allocation5], 128
    $region109: #{tpu_custom_call.1} parent=1 // pred_fallthru
      _
    %921 = vsyncpa [#allocation4], 1
    %922 = vsyncpa [#allocation7], 1
    %923 = vsyncpa [#allocation10], 1
    %924 = vsyncpa [#allocation13], 1
    %925 = vsyncpa [#allocation5], 1

</llo_original>
